<compile_context>
chip_gen: v5e
topology: v5e:2x2
jax: 0.10.0
libtpu: 0.0.40
codegen_flags: <defaults>
</compile_context>

<pallas_src>
import jax
import jax.numpy as jnp
import numpy as np
from jax.experimental import pallas as pl
from jax.experimental.pallas import tpu as pltpu

EPS = 1e-5


def critic_kernel(state_ref, action_ref, w1_ref, bn1_ref, w2_ref, p2_ref,
                  out_ref):
    Et, B, S = state_ref.shape          # Et evals folded into this grid step
    A = action_ref.shape[-1]
    F1 = w1_ref.shape[1]

    # Flatten the folded evals into one 128-ish-row tile for the MXU.
    s = state_ref[...].reshape(Et * B, S)      # (Et*B, S)
    a = action_ref[...].reshape(Et * B, A)     # (Et*B, A)

    # Unpack the consolidated resident parameter blocks (static slices).
    b1 = bn1_ref[0:1, :]        # (1, F1)
    gamma = bn1_ref[1:2, :]     # (1, F1)
    beta = bn1_ref[2:3, :]      # (1, F1)
    b2 = p2_ref[0:1, :]         # (1, F2)
    w3 = p2_ref[1:2, :]         # (1, F2)
    b3 = p2_ref[2:3, 0:1]       # (1, 1)

    # ---- fc1 + relu (single 128-row MXU matmul) ----
    h1 = jnp.dot(s, w1_ref[...], preferred_element_type=jnp.float32) + b1
    h1 = jnp.maximum(h1, 0.0)                  # (Et*B, F1)

    # ---- BatchNorm1d per minibatch (training mode), single pass ----
    h1_3 = h1.reshape(Et, B, F1)               # split back into evals
    inv_b = jnp.float32(1.0 / B)
    s1 = jnp.sum(h1_3, axis=1, keepdims=True)             # (Et, 1, F1)
    s2 = jnp.sum(h1_3 * h1_3, axis=1, keepdims=True)      # (Et, 1, F1)
    mean = s1 * inv_b
    var = jnp.maximum(s2 * inv_b - mean * mean, 0.0)       # biased var, clamped
    scale = gamma * jax.lax.rsqrt(var + EPS)               # EUP rsqrt
    shift = beta - mean * scale
    xbn = (h1_3 * scale + shift).reshape(Et * B, F1)       # one mul + one add

    # ---- fc2 on concat([xbn, action]) == xbn @ W2[:F1] + a @ W2[F1:] ----
    w2x = w2_ref[0:F1, :]                      # (F1, F2) aligned static slice
    w2a = w2_ref[F1:F1 + A, :]                 # (A,  F2)
    h2 = (jnp.dot(xbn, w2x, preferred_element_type=jnp.float32)
          + jnp.dot(a, w2a, preferred_element_type=jnp.float32)
          + b2)
    h2 = jnp.maximum(h2, 0.0)                  # (Et*B, F2)

    # ---- fc3 (N=1): VPU multiply + XLU lane reduce, per-eval layout ----
    F2 = h2.shape[-1]
    q = jnp.sum(h2.reshape(Et, B, F2) * w3, axis=-1) + b3   # (Et, B)
    out_ref[...] = q


def _pick_fold(E, B, target_rows=128):
    """Largest divisor Et of E with Et*B <= target_rows (>=1)."""
    et_max = max(1, min(E, target_rows // max(B, 1)))
    et = 1
    for d in range(1, et_max + 1):
        if E % d == 0:
            et = d
    return et


def critic_forward_batched(state, action, params):
    """state: (E, B, S), action: (E, B, A)  ->  (E, B, 1).

    Each leading-axis slice is an independent minibatch evaluation (its own
    BatchNorm statistics), all sharing the same parameters.
    """
    E, B, S = state.shape
    A = action.shape[-1]
    F1 = params["w1"].shape[1]
    F2 = params["p2"].shape[1]

    Et = _pick_fold(E, B)          # evals folded per grid step (Et*B ~ 128 rows)
    G = E // Et

    # Activations: Et full minibatches per grid step.
    state_spec = pl.BlockSpec((Et, B, S), lambda g: (g, 0, 0))
    action_spec = pl.BlockSpec((Et, B, A), lambda g: (g, 0, 0))
    # Weights / packed params: same full block every step -> VMEM-resident.
    resident = lambda arr: pl.BlockSpec(arr.shape, lambda g: (0,) * arr.ndim)

    in_specs = [
        state_spec,                      # (E, B, S)
        action_spec,                     # (E, B, A)
        resident(params["w1"]),          # (S, F1)
        resident(params["bn1"]),         # (3, F1)  [b1; gamma; beta]
        resident(params["w2"]),          # (F1+A, F2)
        resident(params["p2"]),          # (3, F2)  [b2; w3; b3*ones]
    ]
    # Lane-dense-ish output: no trailing size-1 dim; one (Et, B) tile/step.
    out_specs = pl.BlockSpec((pl.Squeezed(), Et, B), lambda g: (g, 0, 0))

    weight_elems = S * F1 + 3 * F1 + (F1 + A) * F2 + 3 * F2
    cost = pl.CostEstimate(
        flops=2 * E * B * (S * F1 + (F1 + A) * F2 + F2),
        transcendentals=E * F1,                         # rsqrt per feature/eval
        bytes_accessed=4 * (E * B * (S + A + 1) + weight_elems),
    )

    out3 = pl.pallas_call(
        critic_kernel,
        out_shape=jax.ShapeDtypeStruct((G, Et, B), jnp.float32),
        grid=(G,),
        in_specs=in_specs,
        out_specs=out_specs,
        cost_estimate=cost,
        compiler_params=pltpu.CompilerParams(
            dimension_semantics=("parallel",),   # v7x: split steps across 2 TCs
        ),
    )(state, action, params["w1"], params["bn1"], params["w2"], params["p2"])

    return out3.reshape(E, B)[..., None]       # (E, B, 1)


def critic_forward(state, action, params):
    """Single minibatch convenience wrapper: (B, S), (B, A) -> (B, 1)."""
    out = critic_forward_batched(state[None], action[None], params)
    return out[0]


def make_params(key, state_size, action_size, fc1_units, fc2_units):
    ks = jax.random.split(key, 6)

    # fc1: PyTorch weight shape (fc1_units, state_size); hidden_init uses
    # weight.size()[0] == fc1_units as "fan_in" (as in the reference code).
    lim1 = 1.0 / np.sqrt(fc1_units)
    w1 = jax.random.uniform(ks[0], (fc1_units, state_size), jnp.float32, -lim1, lim1)
    b1 = jax.random.uniform(ks[1], (1, fc1_units), jnp.float32,
                            -1.0 / np.sqrt(state_size), 1.0 / np.sqrt(state_size))

    # fc2: weight shape (fc2_units, fc1_units + action_size)
    lim2 = 1.0 / np.sqrt(fc2_units)
    w2 = jax.random.uniform(ks[2], (fc2_units, fc1_units + action_size),
                            jnp.float32, -lim2, lim2)
    fan2 = fc1_units + action_size
    b2 = jax.random.uniform(ks[3], (1, fc2_units), jnp.float32,
                            -1.0 / np.sqrt(fan2), 1.0 / np.sqrt(fan2))

    # fc3: weight shape (1, fc2_units), uniform(-3e-3, 3e-3); bias keeps the
    # default Linear init.
    w3 = jax.random.uniform(ks[4], (1, fc2_units), jnp.float32, -3e-3, 3e-3)
    b3 = jax.random.uniform(ks[5], (1, 1), jnp.float32,
                            -1.0 / np.sqrt(fc2_units), 1.0 / np.sqrt(fc2_units))

    # BatchNorm1d affine params (PyTorch default init)
    gamma = jnp.ones((1, fc1_units), jnp.float32)
    beta = jnp.zeros((1, fc1_units), jnp.float32)

    return {
        "w1": w1.T,                                           # (S, F1)
        "bn1": jnp.concatenate([b1, gamma, beta], axis=0),    # (3, F1)
        "w2": w2.T,                                           # (F1+A, F2)
        "p2": jnp.concatenate(                                # (3, F2)
            [b2, w3, jnp.full((1, fc2_units), b3[0, 0], jnp.float32)], axis=0),
    }


def critic_reference(state, action, params):
    w1 = params["w1"]
    b1, gamma, beta = (params["bn1"][0:1], params["bn1"][1:2], params["bn1"][2:3])
    w2 = params["w2"]
    b2, w3 = params["p2"][0:1], params["p2"][1:2]
    b3 = params["p2"][2:3, 0:1]

    h1 = jnp.maximum(state @ w1 + b1, 0.0)
    mean = jnp.mean(h1, axis=0, keepdims=True)
    var = jnp.mean((h1 - mean) ** 2, axis=0, keepdims=True)
    xbn = gamma * (h1 - mean) / jnp.sqrt(var + EPS) + beta
    h2 = jnp.maximum(jnp.concatenate([xbn, action], axis=1) @ w2 + b2, 0.0)
    return h2 @ w3.T + b3


if __name__ == "__main__":
    E = 32                                   # independent critic evaluations
    B, state_size, action_size, fc1_units, fc2_units = 8, 16, 8, 64, 32

    key = jax.random.PRNGKey(0)
    k_state, k_action, k_params = jax.random.split(key, 3)

    state = jax.random.normal(k_state, (E, B, state_size), jnp.float32)
    action = jax.random.normal(k_action, (E, B, action_size), jnp.float32)
    params = make_params(k_params, state_size, action_size, fc1_units, fc2_units)

    out = critic_forward_batched(state, action, params)
    jax.block_until_ready(out)

    # Check every independent evaluation against the pure-JAX reference.
    ref = jax.vmap(lambda s, a: critic_reference(s, a, params))(state, action)
    np.testing.assert_allclose(np.asarray(out), np.asarray(ref),
                               rtol=1e-4, atol=1e-5)

    # Also exercise the single-minibatch wrapper (E=1 path, Et=1).
    out1 = critic_forward(state[0], action[0], params)
    jax.block_until_ready(out1)
    np.testing.assert_allclose(np.asarray(out1),
                               np.asarray(critic_reference(state[0], action[0], params)),
                               rtol=1e-4, atol=1e-5)

    print("KERNEL_OK")
</pallas_src>

<mosaic_0001>
module attributes {stable_mosaic.version = 11 : i64} {
  func.func @critic_kernel(%arg0: i32, %arg1: memref<16x8x16xf32, #tpu.memory_space<vmem>>, %arg2: memref<16x8x8xf32, #tpu.memory_space<vmem>>, %arg3: memref<16x64xf32, #tpu.memory_space<vmem>>, %arg4: memref<3x64xf32, #tpu.memory_space<vmem>>, %arg5: memref<72x32xf32, #tpu.memory_space<vmem>>, %arg6: memref<3x32xf32, #tpu.memory_space<vmem>>, %arg7: memref<1x16x8xf32, #tpu.memory_space<vmem>>) attributes {dimension_semantics = [#tpu.dimension_semantics<parallel>], iteration_bounds = array<i64: 2>, scalar_prefetch = 0 : i64, scratch_operands = 0 : i64, tpu.core_type = #tpu.core_type<tc>, window_params = [{transform_indices = @transform_0, window_bounds = array<i64: 16, 8, 16>}, {transform_indices = @transform_1, window_bounds = array<i64: 16, 8, 8>}, {pipeline_mode = #tpu.pipeline_mode<synchronous>, transform_indices = @transform_2, window_bounds = array<i64: 16, 64>}, {pipeline_mode = #tpu.pipeline_mode<synchronous>, transform_indices = @transform_3, window_bounds = array<i64: 3, 64>}, {pipeline_mode = #tpu.pipeline_mode<synchronous>, transform_indices = @transform_4, window_bounds = array<i64: 72, 32>}, {pipeline_mode = #tpu.pipeline_mode<synchronous>, transform_indices = @transform_5, window_bounds = array<i64: 3, 32>}, {transform_indices = @transform_6, window_bounds = array<i64: 1, 16, 8>}]} {
    %c0 = arith.constant 0 : index
    %c0_0 = arith.constant 0 : index
    %c0_1 = arith.constant 0 : index
    %0 = vector.load %arg1[%c0, %c0_0, %c0_1] : memref<16x8x16xf32, #tpu.memory_space<vmem>>, vector<16x8x16xf32>
    %1 = vector.shape_cast %0 : vector<16x8x16xf32> to vector<128x16xf32>
    %c0_2 = arith.constant 0 : index
    %c0_3 = arith.constant 0 : index
    %c0_4 = arith.constant 0 : index
    %2 = vector.load %arg2[%c0_2, %c0_3, %c0_4] : memref<16x8x8xf32, #tpu.memory_space<vmem>>, vector<16x8x8xf32>
    %3 = vector.shape_cast %2 : vector<16x8x8xf32> to vector<128x8xf32>
    %c0_5 = arith.constant 0 : index
    %c0_6 = arith.constant 0 : index
    %4 = vector.load %arg4[%c0_5, %c0_6] : memref<3x64xf32, #tpu.memory_space<vmem>>, vector<1x64xf32>
    %c1 = arith.constant 1 : index
    %c0_7 = arith.constant 0 : index
    %5 = vector.load %arg4[%c1, %c0_7] : memref<3x64xf32, #tpu.memory_space<vmem>>, vector<1x64xf32>
    %c2 = arith.constant 2 : index
    %c0_8 = arith.constant 0 : index
    %6 = vector.load %arg4[%c2, %c0_8] : memref<3x64xf32, #tpu.memory_space<vmem>>, vector<1x64xf32>
    %c0_9 = arith.constant 0 : index
    %c0_10 = arith.constant 0 : index
    %7 = vector.load %arg6[%c0_9, %c0_10] : memref<3x32xf32, #tpu.memory_space<vmem>>, vector<1x32xf32>
    %c1_11 = arith.constant 1 : index
    %c0_12 = arith.constant 0 : index
    %8 = vector.load %arg6[%c1_11, %c0_12] : memref<3x32xf32, #tpu.memory_space<vmem>>, vector<1x32xf32>
    %c2_13 = arith.constant 2 : index
    %c0_14 = arith.constant 0 : index
    %9 = vector.load %arg6[%c2_13, %c0_14] : memref<3x32xf32, #tpu.memory_space<vmem>>, vector<1x1xf32>
    %c0_15 = arith.constant 0 : index
    %c0_16 = arith.constant 0 : index
    %10 = vector.load %arg3[%c0_15, %c0_16] : memref<16x64xf32, #tpu.memory_space<vmem>>, vector<16x64xf32>
    %cst = arith.constant dense<0.000000e+00> : vector<128x64xf32>
    %11 = tpu.matmul %1, %10, %cst {dimension_numbers = #tpu.dot_dimension_numbers<[1], [0], [0], [1], [0, 0, 1, 1], [], []>} : vector<128x16xf32>, vector<16x64xf32>, vector<128x64xf32> -> vector<128x64xf32>
    %12 = vector.broadcast %4 : vector<1x64xf32> to vector<128x64xf32>
    %13 = arith.addf %11, %12 : vector<128x64xf32>
    %cst_17 = arith.constant 0.000000e+00 : f32
    %14 = vector.broadcast %cst_17 : f32 to vector<128x64xf32>
    %15 = arith.maximumf %13, %14 : vector<128x64xf32>
    %16 = vector.shape_cast %15 : vector<128x64xf32> to vector<16x8x64xf32>
    %cst_18 = arith.constant dense<0.000000e+00> : vector<16x64xf32>
    %17 = vector.multi_reduction <add>, %16, %cst_18 [1] : vector<16x8x64xf32> to vector<16x64xf32>
    %18 = vector.shape_cast %17 : vector<16x64xf32> to vector<16x1x64xf32>
    %19 = arith.mulf %16, %16 : vector<16x8x64xf32>
    %cst_19 = arith.constant dense<0.000000e+00> : vector<16x64xf32>
    %20 = vector.multi_reduction <add>, %19, %cst_19 [1] : vector<16x8x64xf32> to vector<16x64xf32>
    %21 = vector.shape_cast %20 : vector<16x64xf32> to vector<16x1x64xf32>
    %cst_20 = arith.constant 1.250000e-01 : f32
    %22 = vector.broadcast %cst_20 : f32 to vector<16x1x64xf32>
    %23 = arith.mulf %18, %22 : vector<16x1x64xf32>
    %cst_21 = arith.constant 1.250000e-01 : f32
    %24 = vector.broadcast %cst_21 : f32 to vector<16x1x64xf32>
    %25 = arith.mulf %21, %24 : vector<16x1x64xf32>
    %26 = arith.mulf %23, %23 : vector<16x1x64xf32>
    %27 = arith.subf %25, %26 : vector<16x1x64xf32>
    %cst_22 = arith.constant 0.000000e+00 : f32
    %28 = vector.broadcast %cst_22 : f32 to vector<16x1x64xf32>
    %29 = arith.maximumf %27, %28 : vector<16x1x64xf32>
    %cst_23 = arith.constant 9.99999974E-6 : f32
    %30 = vector.broadcast %cst_23 : f32 to vector<16x1x64xf32>
    %31 = arith.addf %29, %30 : vector<16x1x64xf32>
    %32 = math.rsqrt %31 : vector<16x1x64xf32>
    %33 = vector.shape_cast %5 : vector<1x64xf32> to vector<1x1x64xf32>
    %34 = vector.broadcast %33 : vector<1x1x64xf32> to vector<16x1x64xf32>
    %35 = arith.mulf %34, %32 : vector<16x1x64xf32>
    %36 = arith.mulf %23, %35 : vector<16x1x64xf32>
    %37 = vector.shape_cast %6 : vector<1x64xf32> to vector<1x1x64xf32>
    %38 = vector.broadcast %37 : vector<1x1x64xf32> to vector<16x1x64xf32>
    %39 = arith.subf %38, %36 : vector<16x1x64xf32>
    %40 = vector.broadcast %35 : vector<16x1x64xf32> to vector<16x8x64xf32>
    %41 = arith.mulf %16, %40 : vector<16x8x64xf32>
    %42 = vector.broadcast %39 : vector<16x1x64xf32> to vector<16x8x64xf32>
    %43 = arith.addf %41, %42 : vector<16x8x64xf32>
    %44 = vector.shape_cast %43 : vector<16x8x64xf32> to vector<128x64xf32>
    %c0_24 = arith.constant 0 : index
    %c0_25 = arith.constant 0 : index
    %45 = vector.load %arg5[%c0_24, %c0_25] : memref<72x32xf32, #tpu.memory_space<vmem>>, vector<64x32xf32>
    %c64 = arith.constant 64 : index
    %c0_26 = arith.constant 0 : index
    %46 = vector.load %arg5[%c64, %c0_26] : memref<72x32xf32, #tpu.memory_space<vmem>>, vector<8x32xf32>
    %cst_27 = arith.constant dense<0.000000e+00> : vector<128x32xf32>
    %47 = tpu.matmul %44, %45, %cst_27 {dimension_numbers = #tpu.dot_dimension_numbers<[1], [0], [0], [1], [0, 0, 1, 1], [], []>} : vector<128x64xf32>, vector<64x32xf32>, vector<128x32xf32> -> vector<128x32xf32>
    %cst_28 = arith.constant dense<0.000000e+00> : vector<128x32xf32>
    %48 = tpu.matmul %3, %46, %cst_28 {dimension_numbers = #tpu.dot_dimension_numbers<[1], [0], [0], [1], [0, 0, 1, 1], [], []>} : vector<128x8xf32>, vector<8x32xf32>, vector<128x32xf32> -> vector<128x32xf32>
    %49 = arith.addf %47, %48 : vector<128x32xf32>
    %50 = vector.broadcast %7 : vector<1x32xf32> to vector<128x32xf32>
    %51 = arith.addf %49, %50 : vector<128x32xf32>
    %cst_29 = arith.constant 0.000000e+00 : f32
    %52 = vector.broadcast %cst_29 : f32 to vector<128x32xf32>
    %53 = arith.maximumf %51, %52 : vector<128x32xf32>
    %54 = vector.shape_cast %53 : vector<128x32xf32> to vector<16x8x32xf32>
    %55 = vector.shape_cast %8 : vector<1x32xf32> to vector<1x1x32xf32>
    %56 = vector.broadcast %55 : vector<1x1x32xf32> to vector<16x8x32xf32>
    %57 = arith.mulf %54, %56 : vector<16x8x32xf32>
    %cst_30 = arith.constant dense<0.000000e+00> : vector<16x8xf32>
    %58 = vector.multi_reduction <add>, %57, %cst_30 [2] : vector<16x8x32xf32> to vector<16x8xf32>
    %59 = vector.broadcast %9 : vector<1x1xf32> to vector<16x8xf32>
    %60 = arith.addf %58, %59 : vector<16x8xf32>
    %c0_31 = arith.constant 0 : index
    %c0_32 = arith.constant 0 : index
    %c0_33 = arith.constant 0 : index
    %61 = vector.load %arg7[%c0_31, %c0_32, %c0_33] : memref<1x16x8xf32, #tpu.memory_space<vmem>>, vector<1x16x8xf32>
    %62 = vector.shape_cast %61 : vector<1x16x8xf32> to vector<16x8xf32>
    %63 = vector.shape_cast %60 : vector<16x8xf32> to vector<1x16x8xf32>
    tpu.vector_store %arg7[%c0_31, %c0_32, %c0_33], %63 {strides = array<i32>} : memref<1x16x8xf32, #tpu.memory_space<vmem>>, vector<1x16x8xf32>,
    return
  }
  func.func @transform_0(%arg0: i32) -> (i32, i32, i32) {
    %c0_i32 = arith.constant 0 : i32
    %c0_i32_0 = arith.constant 0 : i32
    %c0_i32_1 = arith.constant 0 : i32
    return %arg0, %c0_i32, %c0_i32_0 : i32, i32, i32
  }
  func.func @transform_1(%arg0: i32) -> (i32, i32, i32) {
    %c0_i32 = arith.constant 0 : i32
    %c0_i32_0 = arith.constant 0 : i32
    %c0_i32_1 = arith.constant 0 : i32
    return %arg0, %c0_i32, %c0_i32_0 : i32, i32, i32
  }
  func.func @transform_2(%arg0: i32) -> (i32, i32) {
    %c0_i32 = arith.constant 0 : i32
    %c0_i32_0 = arith.constant 0 : i32
    %c0_i32_1 = arith.constant 0 : i32
    return %c0_i32, %c0_i32_0 : i32, i32
  }
  func.func @transform_3(%arg0: i32) -> (i32, i32) {
    %c0_i32 = arith.constant 0 : i32
    %c0_i32_0 = arith.constant 0 : i32
    %c0_i32_1 = arith.constant 0 : i32
    return %c0_i32, %c0_i32_0 : i32, i32
  }
  func.func @transform_4(%arg0: i32) -> (i32, i32) {
    %c0_i32 = arith.constant 0 : i32
    %c0_i32_0 = arith.constant 0 : i32
    %c0_i32_1 = arith.constant 0 : i32
    return %c0_i32, %c0_i32_0 : i32, i32
  }
  func.func @transform_5(%arg0: i32) -> (i32, i32) {
    %c0_i32 = arith.constant 0 : i32
    %c0_i32_0 = arith.constant 0 : i32
    %c0_i32_1 = arith.constant 0 : i32
    return %c0_i32, %c0_i32_0 : i32, i32
  }
  func.func @transform_6(%arg0: i32) -> (i32, i32, i32) {
    %c0_i32 = arith.constant 0 : i32
    %c0_i32_0 = arith.constant 0 : i32
    %c0_i32_1 = arith.constant 0 : i32
    return %arg0, %c0_i32, %c0_i32_0 : i32, i32, i32
  }
}

</mosaic_0001>

<llo_original>
// kernel: tpu_custom_call.1
$region0: #{tpu_custom_call.1}
  #allocation0 [shape = 'u32[]', space=smem, size = 0x4, offset = 0x4, fixed_abs, tag = 'smem constant byte address 0x4 - core index']
  #allocation1 [shape = 'u32[72,128]{1,0:T(1,128)}', space=vmem, size = 0x9000, scoped, tag = 'internal scratch']
  %s0 = inlined_call_operand.vmem [shape: f32[32,8,16], index: 0, kind: input, shape index: {}]
  %s1 = inlined_call_operand.vmem [shape: f32[32,8,8], index: 1, kind: input, shape index: {}]
  %s2 = inlined_call_operand.vmem [shape: f32[16,64], index: 2, kind: input, shape index: {}]
  %s3 = inlined_call_operand.vmem [shape: f32[3,64], index: 3, kind: input, shape index: {}]
  %s4 = inlined_call_operand.vmem [shape: f32[72,32], index: 4, kind: input, shape index: {}]
  %s5 = inlined_call_operand.vmem [shape: f32[3,32], index: 5, kind: input, shape index: {}]
  %s6 = inlined_call_operand.vmem [shape: f32[2,16,8], index: 6, kind: output, shape index: {}]
  %s7 = sld [smem:[#allocation0]]
  $region57: #{tpu_custom_call.1} parent=0
    _
  %s9 = ssub.s32 1, %s7
  %s10 = scalar_select 0, %s9, %s7
  loop: start=0, step=1, limit=4
  $region2: #{tpu_custom_call.1} parent=0 // loop_pre_header
    _
  $region3: #{tpu_custom_call.1} parent=0 // loop_header
    %s12 = sphi 0, %s16
    %p13 = scmp.ge.s32.totalorder %s12, 4
    %s22 = sphi 0, %s24
    %s25 = sphi 0, %s22
    %s26 = sphi 0, %s25
    %s42 = sphi 0, %s26
    %s48 = sphi 0, %s50
    %s51 = sphi 0, %s48
    %s52 = sphi 0, %s51
    %s68 = sphi 0, %s52
    %s72 = sphi 0, %s72
    %s74 = sphi 0, %s72
    %s75 = sphi 0, %s74
    %s89 = sphi 0, %s75
    %s93 = sphi 0, %s93
    %s95 = sphi 0, %s93
    %s96 = sphi 0, %s95
    %s110 = sphi 0, %s96
    %s114 = sphi 0, %s114
    %s116 = sphi 0, %s114
    %s117 = sphi 0, %s116
    %s131 = sphi 0, %s117
    %s135 = sphi 0, %s135
    %s137 = sphi 0, %s135
    %s138 = sphi 0, %s137
    %s152 = sphi 0, %s138
    %s158 = sphi 0, %s160
    %s161 = sphi 0, %s158
    %s162 = sphi 0, %s161
    %s178 = sphi 0, %s162
  $region4: #{tpu_custom_call.1} parent=0 // loop_header_branch
    %15 = sbr.rel (%p13) target = $region8
  $region5: #{tpu_custom_call.1} parent=0 // loop_body
    %s17 = ssub.s32 %s12, 1
    %s18 = ssub.s32 %s12, 2
    %s19 = sadd.s32 %s12, 1
    %s20 = ssub.s32 %s12, %s19
    %p21 = scmp.eq.s32.totalorder %s20, 0
    %s23 = sadd.s32 %s22, 1
    %s24 = scalar_select %p21, %s22, %s23
    %p27 = pneg %p21
    %p28 = scmp.eq.s32.totalorder %s12, 1
    %p29 = por %p27, %p28
    %p30 = scmp.ne.s32.totalorder %s22, %s25
    %p31 = scmp.eq.s32.totalorder %s12, 0
    %p32 = por %p30, %p31
    %p33 = scmp.ne.s32.totalorder %s22, %s25
    %p34 = scmp.eq.s32.totalorder %s17, 1
    %p35 = por %p33, %p34
    %p36 = scmp.ne.s32.totalorder %s25, %s26
    %p37 = scmp.eq.s32.totalorder %s17, 0
    %p38 = por %p36, %p37
    %p39 = scmp.ne.s32.totalorder %s25, %s26
    %p40 = scmp.eq.s32.totalorder %s18, 1
    %p41 = por %p39, %p40
    %p43 = scmp.ne.s32.totalorder %s26, %s42
    %p44 = scmp.eq.s32.totalorder %s18, 0
    %p45 = por %p43, %p44
    %s46 = ssub.s32 %s12, %s19
    %p47 = scmp.eq.s32.totalorder %s46, 0
    %s49 = sadd.s32 %s48, 1
    %s50 = scalar_select %p47, %s48, %s49
    %p53 = pneg %p47
    %p54 = scmp.eq.s32.totalorder %s12, 1
    %p55 = por %p53, %p54
    %p56 = scmp.ne.s32.totalorder %s48, %s51
    %p57 = scmp.eq.s32.totalorder %s12, 0
    %p58 = por %p56, %p57
    %p59 = scmp.ne.s32.totalorder %s48, %s51
    %p60 = scmp.eq.s32.totalorder %s17, 1
    %p61 = por %p59, %p60
    %p62 = scmp.ne.s32.totalorder %s51, %s52
    %p63 = scmp.eq.s32.totalorder %s17, 0
    %p64 = por %p62, %p63
    %p65 = scmp.ne.s32.totalorder %s51, %s52
    %p66 = scmp.eq.s32.totalorder %s18, 1
    %p67 = por %p65, %p66
    %p69 = scmp.ne.s32.totalorder %s52, %s68
    %p70 = scmp.eq.s32.totalorder %s18, 0
    %p71 = por %p69, %p70
    %s73 = sadd.s32 %s72, 1
    %p76 = scmp.eq.s32.totalorder %s12, 1
    %p77 = scmp.ne.s32.totalorder %s72, %s74
    %p78 = scmp.eq.s32.totalorder %s12, 0
    %p79 = por %p77, %p78
    %p80 = scmp.ne.s32.totalorder %s72, %s74
    %p81 = scmp.eq.s32.totalorder %s17, 1
    %p82 = por %p80, %p81
    %p83 = scmp.ne.s32.totalorder %s74, %s75
    %p84 = scmp.eq.s32.totalorder %s17, 0
    %p85 = por %p83, %p84
    %p86 = scmp.ne.s32.totalorder %s74, %s75
    %p87 = scmp.eq.s32.totalorder %s18, 1
    %p88 = por %p86, %p87
    %p90 = scmp.ne.s32.totalorder %s75, %s89
    %p91 = scmp.eq.s32.totalorder %s18, 0
    %p92 = por %p90, %p91
    %s94 = sadd.s32 %s93, 1
    %p97 = scmp.eq.s32.totalorder %s12, 1
    %p98 = scmp.ne.s32.totalorder %s93, %s95
    %p99 = scmp.eq.s32.totalorder %s12, 0
    %p100 = por %p98, %p99
    %p101 = scmp.ne.s32.totalorder %s93, %s95
    %p102 = scmp.eq.s32.totalorder %s17, 1
    %p103 = por %p101, %p102
    %p104 = scmp.ne.s32.totalorder %s95, %s96
    %p105 = scmp.eq.s32.totalorder %s17, 0
    %p106 = por %p104, %p105
    %p107 = scmp.ne.s32.totalorder %s95, %s96
    %p108 = scmp.eq.s32.totalorder %s18, 1
    %p109 = por %p107, %p108
    %p111 = scmp.ne.s32.totalorder %s96, %s110
    %p112 = scmp.eq.s32.totalorder %s18, 0
    %p113 = por %p111, %p112
    %s115 = sadd.s32 %s114, 1
    %p118 = scmp.eq.s32.totalorder %s12, 1
    %p119 = scmp.ne.s32.totalorder %s114, %s116
    %p120 = scmp.eq.s32.totalorder %s12, 0
    %p121 = por %p119, %p120
    %p122 = scmp.ne.s32.totalorder %s114, %s116
    %p123 = scmp.eq.s32.totalorder %s17, 1
    %p124 = por %p122, %p123
    %p125 = scmp.ne.s32.totalorder %s116, %s117
    %p126 = scmp.eq.s32.totalorder %s17, 0
    %p127 = por %p125, %p126
    %p128 = scmp.ne.s32.totalorder %s116, %s117
    %p129 = scmp.eq.s32.totalorder %s18, 1
    %p130 = por %p128, %p129
    %p132 = scmp.ne.s32.totalorder %s117, %s131
    %p133 = scmp.eq.s32.totalorder %s18, 0
    %p134 = por %p132, %p133
    %s136 = sadd.s32 %s135, 1
    %p139 = scmp.eq.s32.totalorder %s12, 1
    %p140 = scmp.ne.s32.totalorder %s135, %s137
    %p141 = scmp.eq.s32.totalorder %s12, 0
    %p142 = por %p140, %p141
    %p143 = scmp.ne.s32.totalorder %s135, %s137
    %p144 = scmp.eq.s32.totalorder %s17, 1
    %p145 = por %p143, %p144
    %p146 = scmp.ne.s32.totalorder %s137, %s138
    %p147 = scmp.eq.s32.totalorder %s17, 0
    %p148 = por %p146, %p147
    %p149 = scmp.ne.s32.totalorder %s137, %s138
    %p150 = scmp.eq.s32.totalorder %s18, 1
    %p151 = por %p149, %p150
    %p153 = scmp.ne.s32.totalorder %s138, %s152
    %p154 = scmp.eq.s32.totalorder %s18, 0
    %p155 = por %p153, %p154
    %s156 = ssub.s32 %s12, %s19
    %p157 = scmp.eq.s32.totalorder %s156, 0
    %s159 = sadd.s32 %s158, 1
    %s160 = scalar_select %p157, %s158, %s159
    %p163 = pneg %p157
    %p164 = scmp.eq.s32.totalorder %s12, 1
    %p165 = por %p163, %p164
    %p166 = scmp.ne.s32.totalorder %s158, %s161
    %p167 = scmp.eq.s32.totalorder %s12, 0
    %p168 = por %p166, %p167
    %p169 = scmp.ne.s32.totalorder %s158, %s161
    %p170 = scmp.eq.s32.totalorder %s17, 1
    %p171 = por %p169, %p170
    %p172 = scmp.ne.s32.totalorder %s161, %s162
    %p173 = scmp.eq.s32.totalorder %s17, 0
    %p174 = por %p172, %p173
    %p175 = scmp.ne.s32.totalorder %s161, %s162
    %p176 = scmp.eq.s32.totalorder %s18, 1
    %p177 = por %p175, %p176
    %p179 = scmp.ne.s32.totalorder %s162, %s178
    %p180 = scmp.eq.s32.totalorder %s18, 0
    %p181 = por %p179, %p180
    %p182 = scmp.le.s32.totalorder 1, %s12
    %p183 = scmp.lt.s32.totalorder %s12, 3
    %p184 = pnand %p182, %p183
    %p185 = pneg %p184
    // Predicated region
    $region9: #{tpu_custom_call.1} parent=5 // pred_check
      _
    $region10: #{tpu_custom_call.1} parent=5 // pred_check_branch
      %187 = sbr.rel (%p184) target = $region12
    $region11: #{tpu_custom_call.1} parent=5 // pred_region
      %s188 = ssub.s32 %s12, 1
      // Predicated region
      $region13: #{tpu_custom_call.1} parent=11 // pred_check
        %p189 = pneg %p85
      $region14: #{tpu_custom_call.1} parent=11 // pred_check_branch
        %191 = sbr.rel (%p189) target = $region16
      $region15: #{tpu_custom_call.1} parent=11 // pred_region
        _
      $region16: #{tpu_custom_call.1} parent=11 // pred_fallthru
        _
      // Predicated region
      $region17: #{tpu_custom_call.1} parent=11 // pred_check
        %p192 = pneg %p106
      $region18: #{tpu_custom_call.1} parent=11 // pred_check_branch
        %194 = sbr.rel (%p192) target = $region20
      $region19: #{tpu_custom_call.1} parent=11 // pred_region
        _
      $region20: #{tpu_custom_call.1} parent=11 // pred_fallthru
        _
      // Predicated region
      $region21: #{tpu_custom_call.1} parent=11 // pred_check
        %p195 = pneg %p127
      $region22: #{tpu_custom_call.1} parent=11 // pred_check_branch
        %197 = sbr.rel (%p195) target = $region24
      $region23: #{tpu_custom_call.1} parent=11 // pred_region
        _
      $region24: #{tpu_custom_call.1} parent=11 // pred_fallthru
        _
      // Predicated region
      $region25: #{tpu_custom_call.1} parent=11 // pred_check
        %p198 = pneg %p148
      $region26: #{tpu_custom_call.1} parent=11 // pred_check_branch
        %200 = sbr.rel (%p198) target = $region28
      $region27: #{tpu_custom_call.1} parent=11 // pred_region
        _
      $region28: #{tpu_custom_call.1} parent=11 // pred_fallthru
        _
    $region12: #{tpu_custom_call.1} parent=5 // pred_fallthru
      _
    %p201 = scmp.lt.s32.totalorder %s12, 2
    // Predicated region
    $region29: #{tpu_custom_call.1} parent=5 // pred_check
      %p202 = pneg %p201
    $region30: #{tpu_custom_call.1} parent=5 // pred_check_branch
      %204 = sbr.rel (%p202) target = $region32
    $region31: #{tpu_custom_call.1} parent=5 // pred_region
      // Predicated region
      $region33: #{tpu_custom_call.1} parent=31 // pred_check
        %p205 = pneg %p32
      $region34: #{tpu_custom_call.1} parent=31 // pred_check_branch
        %207 = sbr.rel (%p205) target = $region36
      $region35: #{tpu_custom_call.1} parent=31 // pred_region
        %s208 = smul.u32 16, %s12
        %p209 = scmp.lt.s32.totalorder %s208, 31
        %s210 = scalar_select %p209, %s208, 31
        %s211 = smul.addr %s210, 8
        %s212 = scalar_lea.vmem %s0, %s211
        %s213 = smul.u32 16, %s12
      $region36: #{tpu_custom_call.1} parent=31 // pred_fallthru
        _
      // Predicated region
      $region37: #{tpu_custom_call.1} parent=31 // pred_check
        %p214 = pneg %p58
      $region38: #{tpu_custom_call.1} parent=31 // pred_check_branch
        %216 = sbr.rel (%p214) target = $region40
      $region39: #{tpu_custom_call.1} parent=31 // pred_region
        %s217 = smul.u32 16, %s12
        %p218 = scmp.lt.s32.totalorder %s217, 31
        %s219 = scalar_select %p218, %s217, 31
        %s220 = smul.addr %s219, 8
        %s221 = scalar_lea.vmem %s1, %s220
        %s222 = smul.u32 16, %s12
      $region40: #{tpu_custom_call.1} parent=31 // pred_fallthru
        _
    $region32: #{tpu_custom_call.1} parent=5 // pred_fallthru
      _
    %p223 = scmp.le.s32.totalorder 1, %s12
    %p224 = scmp.lt.s32.totalorder %s12, 3
    %p225 = pnand %p223, %p224
    %p226 = pneg %p225
    // Predicated region
    $region41: #{tpu_custom_call.1} parent=5 // pred_check
      _
    $region42: #{tpu_custom_call.1} parent=5 // pred_check_branch
      %228 = sbr.rel (%p225) target = $region44
    $region43: #{tpu_custom_call.1} parent=5 // pred_region
      %s229 = ssub.s32 %s12, 1
      %s230 = smul.u32 16, %s17
      %p231 = scmp.lt.s32.totalorder %s230, 31
      %s232 = scalar_select %p231, %s230, 31
      %s233 = smul.addr %s232, 8
      %s234 = scalar_lea.vmem %s0, %s233
      %p235 = pneg %p38
      %p236 = pneg %p35
      %s237 = smul.u32 16, %s17
      %p238 = scmp.lt.s32.totalorder %s237, 31
      %s239 = scalar_select %p238, %s237, 31
      %s240 = smul.addr %s239, 8
      %s241 = scalar_lea.vmem %s1, %s240
      %p242 = pneg %p64
      %p243 = pneg %p61
      %p244 = pneg %p85
      %p245 = pneg %p82
      %p246 = pneg %p106
      %p247 = pneg %p103
      %p248 = pneg %p127
      %p249 = pneg %p124
      %p250 = pneg %p148
      %p251 = pneg %p145
      %p252 = pneg %p174
      %p253 = pneg %p171
      %p254 = scmp.lt.s32.totalorder %s17, 1
      %s255 = scalar_select %p254, %s17, 1
      %s256 = smul.addr %s255, 2
      %s257 = smul.addr %s256, 8
      %s258 = scalar_lea.vmem %s6, %s257
      %s259 = smul.u32 16, %s17
      %p260 = scmp.lt.s32.totalorder %s259, 31
      %s261 = scalar_select %p260, %s259, 31
      %s262 = smul.addr %s261, 8
      %s263 = scalar_lea.vmem %s0, %s262
      %s264 = smul.u32 16, %s17
      %s265 = smul.u32 16, %s17
      %p266 = scmp.lt.s32.totalorder %s265, 31
      %s267 = scalar_select %p266, %s265, 31
      %s268 = smul.addr %s267, 8
      %s269 = scalar_lea.vmem %s1, %s268
      %s270 = smul.u32 16, %s17
      %p271 = scmp.lt.s32.totalorder %s17, 1
      %s272 = scalar_select %p271, %s17, 1
      %s273 = smul.addr %s272, 2
      %s274 = smul.addr %s273, 8
      %s275 = scalar_lea.vmem %s6, %s274
      %v276 = vld [vmem:[%s263] sm:$0xff]
      %v277 = vld [vmem:[%s263 + $0x8] sm:$0xff]
      %v278 = vld [vmem:[%s263 + $0x10] sm:$0xff]
      %v279 = vld [vmem:[%s263 + $0x18] sm:$0xff]
      %v280 = vld [vmem:[%s263 + $0x20] sm:$0xff]
      %v281 = vld [vmem:[%s263 + $0x28] sm:$0xff]
      %v282 = vld [vmem:[%s263 + $0x30] sm:$0xff]
      %v283 = vld [vmem:[%s263 + $0x38] sm:$0xff]
      %v284 = vld [vmem:[%s263 + $0x40] sm:$0xff]
      %v285 = vld [vmem:[%s263 + $0x48] sm:$0xff]
      %v286 = vld [vmem:[%s263 + $0x50] sm:$0xff]
      %v287 = vld [vmem:[%s263 + $0x58] sm:$0xff]
      %v288 = vld [vmem:[%s263 + $0x60] sm:$0xff]
      %v289 = vld [vmem:[%s263 + $0x68] sm:$0xff]
      %v290 = vld [vmem:[%s263 + $0x70] sm:$0xff]
      %v291 = vld [vmem:[%s263 + $0x78] sm:$0xff]
      %v292 = vld [vmem:[%s269] sm:$0xff]
      %v293 = vld [vmem:[%s269 + $0x8] sm:$0xff]
      %v294 = vld [vmem:[%s269 + $0x10] sm:$0xff]
      %v295 = vld [vmem:[%s269 + $0x18] sm:$0xff]
      %v296 = vld [vmem:[%s269 + $0x20] sm:$0xff]
      %v297 = vld [vmem:[%s269 + $0x28] sm:$0xff]
      %v298 = vld [vmem:[%s269 + $0x30] sm:$0xff]
      %v299 = vld [vmem:[%s269 + $0x38] sm:$0xff]
      %v300 = vld [vmem:[%s269 + $0x40] sm:$0xff]
      %v301 = vld [vmem:[%s269 + $0x48] sm:$0xff]
      %v302 = vld [vmem:[%s269 + $0x50] sm:$0xff]
      %v303 = vld [vmem:[%s269 + $0x58] sm:$0xff]
      %v304 = vld [vmem:[%s269 + $0x60] sm:$0xff]
      %v305 = vld [vmem:[%s269 + $0x68] sm:$0xff]
      %v306 = vld [vmem:[%s269 + $0x70] sm:$0xff]
      %v307 = vld [vmem:[%s269 + $0x78] sm:$0xff]
      %v308 = vld [vmem:[%s3] sm:$0x1]
      %v309 = vld [vmem:[%s3 + $0x1] sm:$0x1]
      %v310 = vld [vmem:[%s3 + $0x2] sm:$0x1]
      %v311 = vld [vmem:[%s5] sm:$0x1]
      %v312 = vld [vmem:[%s5 + $0x1] sm:$0x1]
      %v313 = vld [vmem:[%s5 + $0x2] sm:$0x1]
      %v314 = vld [vmem:[%s2] sm:$0xff]
      %v315 = vld [vmem:[%s2 + $0x8] sm:$0xff]
      %v316 = vperm.slane %v308, 0
      %vm317 = vcmask 130048
      %v319 = vsel %vm317, %v276, 0
      %v322 = vsel %vm317, %v277, 0
      %v325 = vsel %vm317, %v278, 0
      %v328 = vsel %vm317, %v279, 0
      %v331 = vsel %vm317, %v280, 0
      %v334 = vsel %vm317, %v281, 0
      %v337 = vsel %vm317, %v282, 0
      %v340 = vsel %vm317, %v283, 0
      %v343 = vsel %vm317, %v284, 0
      %v346 = vsel %vm317, %v285, 0
      %v349 = vsel %vm317, %v286, 0
      %v352 = vsel %vm317, %v287, 0
      %v355 = vsel %vm317, %v288, 0
      %v358 = vsel %vm317, %v289, 0
      %v361 = vsel %vm317, %v290, 0
      %v364 = vsel %vm317, %v291, 0
      %366 = vmatpush.msra.mxu0 0.0
      %367 = vmatpush.msra.mxu0 0.0
      %368 = vmatpush.msra.mxu0 0.0
      %369 = vmatpush.msra.mxu0 0.0
      %370 = vmatpush.msra.mxu0 0.0
      %371 = vmatpush.msra.mxu0 0.0
      %372 = vmatpush.msra.mxu0 0.0
      %373 = vmatpush.msra.mxu0 0.0
      %374 = vmatpush.msra.mxu0 0.0
      %375 = vmatpush.msra.mxu0 0.0
      %376 = vmatpush.msra.mxu0 0.0
      %377 = vmatpush.msra.mxu0 0.0
      %378 = vmatpush.msra.mxu0 0.0
      %379 = vmatpush.msra.mxu0 0.0
      %380 = vmatpush.msra.mxu0 %v315
      %381 = vmatpush.msra.mxu0 %v314
      %382 = vmatmul.f32.gmra.mxu0 %v319
      %v383 = vpop.f32.mrf.mxu0
      %v384 = vadd.f32 %v316, %v383
      %385 = vmatmul.f32.gmra.mxu0 %v322
      %v386 = vpop.f32.mrf.mxu0
      %v387 = vadd.f32 %v316, %v386
      %388 = vmatmul.f32.gmra.mxu0 %v325
      %v389 = vpop.f32.mrf.mxu0
      %v390 = vadd.f32 %v316, %v389
      %391 = vmatmul.f32.gmra.mxu0 %v328
      %v392 = vpop.f32.mrf.mxu0
      %v393 = vadd.f32 %v316, %v392
      %394 = vmatmul.f32.gmra.mxu0 %v331
      %v395 = vpop.f32.mrf.mxu0
      %v396 = vadd.f32 %v316, %v395
      %397 = vmatmul.f32.gmra.mxu0 %v334
      %v398 = vpop.f32.mrf.mxu0
      %v399 = vadd.f32 %v316, %v398
      %400 = vmatmul.f32.gmra.mxu0 %v337
      %v401 = vpop.f32.mrf.mxu0
      %v402 = vadd.f32 %v316, %v401
      %403 = vmatmul.f32.gmra.mxu0 %v340
      %v404 = vpop.f32.mrf.mxu0
      %v405 = vadd.f32 %v316, %v404
      %406 = vmatmul.f32.gmra.mxu0 %v343
      %v407 = vpop.f32.mrf.mxu0
      %v408 = vadd.f32 %v316, %v407
      %409 = vmatmul.f32.gmra.mxu0 %v346
      %v410 = vpop.f32.mrf.mxu0
      %v411 = vadd.f32 %v316, %v410
      %412 = vmatmul.f32.gmra.mxu0 %v349
      %v413 = vpop.f32.mrf.mxu0
      %v414 = vadd.f32 %v316, %v413
      %415 = vmatmul.f32.gmra.mxu0 %v352
      %v416 = vpop.f32.mrf.mxu0
      %v417 = vadd.f32 %v316, %v416
      %418 = vmatmul.f32.gmra.mxu0 %v355
      %v419 = vpop.f32.mrf.mxu0
      %v420 = vadd.f32 %v316, %v419
      %421 = vmatmul.f32.gmra.mxu0 %v358
      %v422 = vpop.f32.mrf.mxu0
      %v423 = vadd.f32 %v316, %v422
      %424 = vmatmul.f32.gmra.mxu0 %v361
      %v425 = vpop.f32.mrf.mxu0
      %v426 = vadd.f32 %v316, %v425
      %427 = vmatmul.f32.gmra.mxu0 %v364
      %v428 = vpop.f32.mrf.mxu0
      %v429 = vadd.f32 %v316, %v428
      %430 = vdwg.mxu0
      %v431 = vmax.f32 %v384, 0.0
      %v432 = vmax.f32 %v387, 0.0
      %v433 = vmax.f32 %v390, 0.0
      %v434 = vmax.f32 %v393, 0.0
      %v435 = vmax.f32 %v396, 0.0
      %v436 = vmax.f32 %v399, 0.0
      %v437 = vmax.f32 %v402, 0.0
      %v438 = vmax.f32 %v405, 0.0
      %v439 = vmax.f32 %v408, 0.0
      %v440 = vmax.f32 %v411, 0.0
      %v441 = vmax.f32 %v414, 0.0
      %v442 = vmax.f32 %v417, 0.0
      %v443 = vmax.f32 %v420, 0.0
      %v444 = vmax.f32 %v423, 0.0
      %v445 = vmax.f32 %v426, 0.0
      %v446 = vmax.f32 %v429, 0.0
      %vm447 = vcmask 523264
      %v448 = vsel %vm447, %v431, 0.0
      %v449 = vrot.slane %v448, 4
      %v450 = vadd.f32 %v448, %v449
      %v451 = vrot.slane %v450, 2
      %v452 = vadd.f32 %v450, %v451
      %v453 = vrot.slane %v452, 1
      %v454 = vadd.f32 %v452, %v453
      %v455 = vsel %vm447, %v432, 0.0
      %v456 = vrot.slane %v455, 4
      %v457 = vadd.f32 %v455, %v456
      %v458 = vrot.slane %v457, 2
      %v459 = vadd.f32 %v457, %v458
      %v460 = vrot.slane %v459, 1
      %v461 = vadd.f32 %v459, %v460
      %v462 = vsel %vm447, %v433, 0.0
      %v463 = vrot.slane %v462, 4
      %v464 = vadd.f32 %v462, %v463
      %v465 = vrot.slane %v464, 2
      %v466 = vadd.f32 %v464, %v465
      %v467 = vrot.slane %v466, 1
      %v468 = vadd.f32 %v466, %v467
      %v469 = vsel %vm447, %v434, 0.0
      %v470 = vrot.slane %v469, 4
      %v471 = vadd.f32 %v469, %v470
      %v472 = vrot.slane %v471, 2
      %v473 = vadd.f32 %v471, %v472
      %v474 = vrot.slane %v473, 1
      %v475 = vadd.f32 %v473, %v474
      %v476 = vsel %vm447, %v435, 0.0
      %v477 = vrot.slane %v476, 4
      %v478 = vadd.f32 %v476, %v477
      %v479 = vrot.slane %v478, 2
      %v480 = vadd.f32 %v478, %v479
      %v481 = vrot.slane %v480, 1
      %v482 = vadd.f32 %v480, %v481
      %v483 = vsel %vm447, %v436, 0.0
      %v484 = vrot.slane %v483, 4
      %v485 = vadd.f32 %v483, %v484
      %v486 = vrot.slane %v485, 2
      %v487 = vadd.f32 %v485, %v486
      %v488 = vrot.slane %v487, 1
      %v489 = vadd.f32 %v487, %v488
      %v490 = vsel %vm447, %v437, 0.0
      %v491 = vrot.slane %v490, 4
      %v492 = vadd.f32 %v490, %v491
      %v493 = vrot.slane %v492, 2
      %v494 = vadd.f32 %v492, %v493
      %v495 = vrot.slane %v494, 1
      %v496 = vadd.f32 %v494, %v495
      %v497 = vsel %vm447, %v438, 0.0
      %v498 = vrot.slane %v497, 4
      %v499 = vadd.f32 %v497, %v498
      %v500 = vrot.slane %v499, 2
      %v501 = vadd.f32 %v499, %v500
      %v502 = vrot.slane %v501, 1
      %v503 = vadd.f32 %v501, %v502
      %v504 = vsel %vm447, %v439, 0.0
      %v505 = vrot.slane %v504, 4
      %v506 = vadd.f32 %v504, %v505
      %v507 = vrot.slane %v506, 2
      %v508 = vadd.f32 %v506, %v507
      %v509 = vrot.slane %v508, 1
      %v510 = vadd.f32 %v508, %v509
      %v511 = vsel %vm447, %v440, 0.0
      %v512 = vrot.slane %v511, 4
      %v513 = vadd.f32 %v511, %v512
      %v514 = vrot.slane %v513, 2
      %v515 = vadd.f32 %v513, %v514
      %v516 = vrot.slane %v515, 1
      %v517 = vadd.f32 %v515, %v516
      %v518 = vsel %vm447, %v441, 0.0
      %v519 = vrot.slane %v518, 4
      %v520 = vadd.f32 %v518, %v519
      %v521 = vrot.slane %v520, 2
      %v522 = vadd.f32 %v520, %v521
      %v523 = vrot.slane %v522, 1
      %v524 = vadd.f32 %v522, %v523
      %v525 = vsel %vm447, %v442, 0.0
      %v526 = vrot.slane %v525, 4
      %v527 = vadd.f32 %v525, %v526
      %v528 = vrot.slane %v527, 2
      %v529 = vadd.f32 %v527, %v528
      %v530 = vrot.slane %v529, 1
      %v531 = vadd.f32 %v529, %v530
      %v532 = vsel %vm447, %v443, 0.0
      %v533 = vrot.slane %v532, 4
      %v534 = vadd.f32 %v532, %v533
      %v535 = vrot.slane %v534, 2
      %v536 = vadd.f32 %v534, %v535
      %v537 = vrot.slane %v536, 1
      %v538 = vadd.f32 %v536, %v537
      %v539 = vsel %vm447, %v444, 0.0
      %v540 = vrot.slane %v539, 4
      %v541 = vadd.f32 %v539, %v540
      %v542 = vrot.slane %v541, 2
      %v543 = vadd.f32 %v541, %v542
      %v544 = vrot.slane %v543, 1
      %v545 = vadd.f32 %v543, %v544
      %v546 = vsel %vm447, %v445, 0.0
      %v547 = vrot.slane %v546, 4
      %v548 = vadd.f32 %v546, %v547
      %v549 = vrot.slane %v548, 2
      %v550 = vadd.f32 %v548, %v549
      %v551 = vrot.slane %v550, 1
      %v552 = vadd.f32 %v550, %v551
      %v553 = vsel %vm447, %v446, 0.0
      %v554 = vrot.slane %v553, 4
      %v555 = vadd.f32 %v553, %v554
      %v556 = vrot.slane %v555, 2
      %v557 = vadd.f32 %v555, %v556
      %v558 = vrot.slane %v557, 1
      %v559 = vadd.f32 %v557, %v558
      %v560 = vmul.f32 %v431, %v431
      %v561 = vmul.f32 %v432, %v432
      %v562 = vmul.f32 %v433, %v433
      %v563 = vmul.f32 %v434, %v434
      %v564 = vmul.f32 %v435, %v435
      %v565 = vmul.f32 %v436, %v436
      %v566 = vmul.f32 %v437, %v437
      %v567 = vmul.f32 %v438, %v438
      %v568 = vmul.f32 %v439, %v439
      %v569 = vmul.f32 %v440, %v440
      %v570 = vmul.f32 %v441, %v441
      %v571 = vmul.f32 %v442, %v442
      %v572 = vmul.f32 %v443, %v443
      %v573 = vmul.f32 %v444, %v444
      %v574 = vmul.f32 %v445, %v445
      %v575 = vmul.f32 %v446, %v446
      %v576 = vsel %vm447, %v560, 0.0
      %v577 = vrot.slane %v576, 4
      %v578 = vadd.f32 %v576, %v577
      %v579 = vrot.slane %v578, 2
      %v580 = vadd.f32 %v578, %v579
      %v581 = vrot.slane %v580, 1
      %v582 = vadd.f32 %v580, %v581
      %v583 = vsel %vm447, %v561, 0.0
      %v584 = vrot.slane %v583, 4
      %v585 = vadd.f32 %v583, %v584
      %v586 = vrot.slane %v585, 2
      %v587 = vadd.f32 %v585, %v586
      %v588 = vrot.slane %v587, 1
      %v589 = vadd.f32 %v587, %v588
      %v590 = vsel %vm447, %v562, 0.0
      %v591 = vrot.slane %v590, 4
      %v592 = vadd.f32 %v590, %v591
      %v593 = vrot.slane %v592, 2
      %v594 = vadd.f32 %v592, %v593
      %v595 = vrot.slane %v594, 1
      %v596 = vadd.f32 %v594, %v595
      %v597 = vsel %vm447, %v563, 0.0
      %v598 = vrot.slane %v597, 4
      %v599 = vadd.f32 %v597, %v598
      %v600 = vrot.slane %v599, 2
      %v601 = vadd.f32 %v599, %v600
      %v602 = vrot.slane %v601, 1
      %v603 = vadd.f32 %v601, %v602
      %v604 = vsel %vm447, %v564, 0.0
      %v605 = vrot.slane %v604, 4
      %v606 = vadd.f32 %v604, %v605
      %v607 = vrot.slane %v606, 2
      %v608 = vadd.f32 %v606, %v607
      %v609 = vrot.slane %v608, 1
      %v610 = vadd.f32 %v608, %v609
      %v611 = vsel %vm447, %v565, 0.0
      %v612 = vrot.slane %v611, 4
      %v613 = vadd.f32 %v611, %v612
      %v614 = vrot.slane %v613, 2
      %v615 = vadd.f32 %v613, %v614
      %v616 = vrot.slane %v615, 1
      %v617 = vadd.f32 %v615, %v616
      %v618 = vsel %vm447, %v566, 0.0
      %v619 = vrot.slane %v618, 4
      %v620 = vadd.f32 %v618, %v619
      %v621 = vrot.slane %v620, 2
      %v622 = vadd.f32 %v620, %v621
      %v623 = vrot.slane %v622, 1
      %v624 = vadd.f32 %v622, %v623
      %v625 = vsel %vm447, %v567, 0.0
      %v626 = vrot.slane %v625, 4
      %v627 = vadd.f32 %v625, %v626
      %v628 = vrot.slane %v627, 2
      %v629 = vadd.f32 %v627, %v628
      %v630 = vrot.slane %v629, 1
      %v631 = vadd.f32 %v629, %v630
      %v632 = vsel %vm447, %v568, 0.0
      %v633 = vrot.slane %v632, 4
      %v634 = vadd.f32 %v632, %v633
      %v635 = vrot.slane %v634, 2
      %v636 = vadd.f32 %v634, %v635
      %v637 = vrot.slane %v636, 1
      %v638 = vadd.f32 %v636, %v637
      %v639 = vsel %vm447, %v569, 0.0
      %v640 = vrot.slane %v639, 4
      %v641 = vadd.f32 %v639, %v640
      %v642 = vrot.slane %v641, 2
      %v643 = vadd.f32 %v641, %v642
      %v644 = vrot.slane %v643, 1
      %v645 = vadd.f32 %v643, %v644
      %v646 = vsel %vm447, %v570, 0.0
      %v647 = vrot.slane %v646, 4
      %v648 = vadd.f32 %v646, %v647
      %v649 = vrot.slane %v648, 2
      %v650 = vadd.f32 %v648, %v649
      %v651 = vrot.slane %v650, 1
      %v652 = vadd.f32 %v650, %v651
      %v653 = vsel %vm447, %v571, 0.0
      %v654 = vrot.slane %v653, 4
      %v655 = vadd.f32 %v653, %v654
      %v656 = vrot.slane %v655, 2
      %v657 = vadd.f32 %v655, %v656
      %v658 = vrot.slane %v657, 1
      %v659 = vadd.f32 %v657, %v658
      %v660 = vsel %vm447, %v572, 0.0
      %v661 = vrot.slane %v660, 4
      %v662 = vadd.f32 %v660, %v661
      %v663 = vrot.slane %v662, 2
      %v664 = vadd.f32 %v662, %v663
      %v665 = vrot.slane %v664, 1
      %v666 = vadd.f32 %v664, %v665
      %v667 = vsel %vm447, %v573, 0.0
      %v668 = vrot.slane %v667, 4
      %v669 = vadd.f32 %v667, %v668
      %v670 = vrot.slane %v669, 2
      %v671 = vadd.f32 %v669, %v670
      %v672 = vrot.slane %v671, 1
      %v673 = vadd.f32 %v671, %v672
      %v674 = vsel %vm447, %v574, 0.0
      %v675 = vrot.slane %v674, 4
      %v676 = vadd.f32 %v674, %v675
      %v677 = vrot.slane %v676, 2
      %v678 = vadd.f32 %v676, %v677
      %v679 = vrot.slane %v678, 1
      %v680 = vadd.f32 %v678, %v679
      %v681 = vsel %vm447, %v575, 0.0
      %v682 = vrot.slane %v681, 4
      %v683 = vadd.f32 %v681, %v682
      %v684 = vrot.slane %v683, 2
      %v685 = vadd.f32 %v683, %v684
      %v686 = vrot.slane %v685, 1
      %v687 = vadd.f32 %v685, %v686
      %v688 = vmul.f32 %v454, 0.125
      %v689 = vmul.f32 %v461, 0.125
      %v690 = vmul.f32 %v468, 0.125
      %v691 = vmul.f32 %v475, 0.125
      %v692 = vmul.f32 %v482, 0.125
      %v693 = vmul.f32 %v489, 0.125
      %v694 = vmul.f32 %v496, 0.125
      %v695 = vmul.f32 %v503, 0.125
      %v696 = vmul.f32 %v510, 0.125
      %v697 = vmul.f32 %v517, 0.125
      %v698 = vmul.f32 %v524, 0.125
      %v699 = vmul.f32 %v531, 0.125
      %v700 = vmul.f32 %v538, 0.125
      %v701 = vmul.f32 %v545, 0.125
      %v702 = vmul.f32 %v552, 0.125
      %v703 = vmul.f32 %v559, 0.125
      %v704 = vmul.f32 %v582, 0.125
      %v705 = vmul.f32 %v589, 0.125
      %v706 = vmul.f32 %v596, 0.125
      %v707 = vmul.f32 %v603, 0.125
      %v708 = vmul.f32 %v610, 0.125
      %v709 = vmul.f32 %v617, 0.125
      %v710 = vmul.f32 %v624, 0.125
      %v711 = vmul.f32 %v631, 0.125
      %v712 = vmul.f32 %v638, 0.125
      %v713 = vmul.f32 %v645, 0.125
      %v714 = vmul.f32 %v652, 0.125
      %v715 = vmul.f32 %v659, 0.125
      %v716 = vmul.f32 %v666, 0.125
      %v717 = vmul.f32 %v673, 0.125
      %v718 = vmul.f32 %v680, 0.125
      %v719 = vmul.f32 %v687, 0.125
      %v720 = vmul.f32 %v688, %v688
      %v721 = vmul.f32 %v689, %v689
      %v722 = vmul.f32 %v690, %v690
      %v723 = vmul.f32 %v691, %v691
      %v724 = vmul.f32 %v692, %v692
      %v725 = vmul.f32 %v693, %v693
      %v726 = vmul.f32 %v694, %v694
      %v727 = vmul.f32 %v695, %v695
      %v728 = vmul.f32 %v696, %v696
      %v729 = vmul.f32 %v697, %v697
      %v730 = vmul.f32 %v698, %v698
      %v731 = vmul.f32 %v699, %v699
      %v732 = vmul.f32 %v700, %v700
      %v733 = vmul.f32 %v701, %v701
      %v734 = vmul.f32 %v702, %v702
      %v735 = vmul.f32 %v703, %v703
      %v736 = vsub.f32 %v704, %v720
      %v737 = vsub.f32 %v705, %v721
      %v738 = vsub.f32 %v706, %v722
      %v739 = vsub.f32 %v707, %v723
      %v740 = vsub.f32 %v708, %v724
      %v741 = vsub.f32 %v709, %v725
      %v742 = vsub.f32 %v710, %v726
      %v743 = vsub.f32 %v711, %v727
      %v744 = vsub.f32 %v712, %v728
      %v745 = vsub.f32 %v713, %v729
      %v746 = vsub.f32 %v714, %v730
      %v747 = vsub.f32 %v715, %v731
      %v748 = vsub.f32 %v716, %v732
      %v749 = vsub.f32 %v717, %v733
      %v750 = vsub.f32 %v718, %v734
      %v751 = vsub.f32 %v719, %v735
      %v752 = vmax.f32 %v736, 0.0
      %v753 = vmax.f32 %v737, 0.0
      %v754 = vmax.f32 %v738, 0.0
      %v755 = vmax.f32 %v739, 0.0
      %v756 = vmax.f32 %v740, 0.0
      %v757 = vmax.f32 %v741, 0.0
      %v758 = vmax.f32 %v742, 0.0
      %v759 = vmax.f32 %v743, 0.0
      %v760 = vmax.f32 %v744, 0.0
      %v761 = vmax.f32 %v745, 0.0
      %v762 = vmax.f32 %v746, 0.0
      %v763 = vmax.f32 %v747, 0.0
      %v764 = vmax.f32 %v748, 0.0
      %v765 = vmax.f32 %v749, 0.0
      %v766 = vmax.f32 %v750, 0.0
      %v767 = vmax.f32 %v751, 0.0
      %v768 = vadd.f32 %v752, 1e-05
      %v769 = vadd.f32 %v753, 1e-05
      %v770 = vadd.f32 %v754, 1e-05
      %v771 = vadd.f32 %v755, 1e-05
      %v772 = vadd.f32 %v756, 1e-05
      %v773 = vadd.f32 %v757, 1e-05
      %v774 = vadd.f32 %v758, 1e-05
      %v775 = vadd.f32 %v759, 1e-05
      %v776 = vadd.f32 %v760, 1e-05
      %v777 = vadd.f32 %v761, 1e-05
      %v778 = vadd.f32 %v762, 1e-05
      %v779 = vadd.f32 %v763, 1e-05
      %v780 = vadd.f32 %v764, 1e-05
      %v781 = vadd.f32 %v765, 1e-05
      %v782 = vadd.f32 %v766, 1e-05
      %v783 = vadd.f32 %v767, 1e-05
      %v784 = vrsqrt.pop %v768
      %v785 = vmul.f32 %v784, %v768
      %v786 = vmul.f32 %v785, %v784
      %v787 = vmul.f32 0.5, %v786
      %v788 = vsub.f32 1.5, %v787
      %v789 = vmul.f32 %v784, %v788
      %vm790 = vweird.f32 %v768
      %vm791 = vweird.f32 %v784
      %vm792 = vmor %vm790, %vm791
      %v793 = vsel %vm792, %v784, %v789
      %v794 = vrsqrt.pop %v769
      %v795 = vmul.f32 %v794, %v769
      %v796 = vmul.f32 %v795, %v794
      %v797 = vmul.f32 0.5, %v796
      %v798 = vsub.f32 1.5, %v797
      %v799 = vmul.f32 %v794, %v798
      %vm800 = vweird.f32 %v769
      %vm801 = vweird.f32 %v794
      %vm802 = vmor %vm800, %vm801
      %v803 = vsel %vm802, %v794, %v799
      %v804 = vrsqrt.pop %v770
      %v805 = vmul.f32 %v804, %v770
      %v806 = vmul.f32 %v805, %v804
      %v807 = vmul.f32 0.5, %v806
      %v808 = vsub.f32 1.5, %v807
      %v809 = vmul.f32 %v804, %v808
      %vm810 = vweird.f32 %v770
      %vm811 = vweird.f32 %v804
      %vm812 = vmor %vm810, %vm811
      %v813 = vsel %vm812, %v804, %v809
      %v814 = vrsqrt.pop %v771
      %v815 = vmul.f32 %v814, %v771
      %v816 = vmul.f32 %v815, %v814
      %v817 = vmul.f32 0.5, %v816
      %v818 = vsub.f32 1.5, %v817
      %v819 = vmul.f32 %v814, %v818
      %vm820 = vweird.f32 %v771
      %vm821 = vweird.f32 %v814
      %vm822 = vmor %vm820, %vm821
      %v823 = vsel %vm822, %v814, %v819
      %v824 = vrsqrt.pop %v772
      %v825 = vmul.f32 %v824, %v772
      %v826 = vmul.f32 %v825, %v824
      %v827 = vmul.f32 0.5, %v826
      %v828 = vsub.f32 1.5, %v827
      %v829 = vmul.f32 %v824, %v828
      %vm830 = vweird.f32 %v772
      %vm831 = vweird.f32 %v824
      %vm832 = vmor %vm830, %vm831
      %v833 = vsel %vm832, %v824, %v829
      %v834 = vrsqrt.pop %v773
      %v835 = vmul.f32 %v834, %v773
      %v836 = vmul.f32 %v835, %v834
      %v837 = vmul.f32 0.5, %v836
      %v838 = vsub.f32 1.5, %v837
      %v839 = vmul.f32 %v834, %v838
      %vm840 = vweird.f32 %v773
      %vm841 = vweird.f32 %v834
      %vm842 = vmor %vm840, %vm841
      %v843 = vsel %vm842, %v834, %v839
      %v844 = vrsqrt.pop %v774
      %v845 = vmul.f32 %v844, %v774
      %v846 = vmul.f32 %v845, %v844
      %v847 = vmul.f32 0.5, %v846
      %v848 = vsub.f32 1.5, %v847
      %v849 = vmul.f32 %v844, %v848
      %vm850 = vweird.f32 %v774
      %vm851 = vweird.f32 %v844
      %vm852 = vmor %vm850, %vm851
      %v853 = vsel %vm852, %v844, %v849
      %v854 = vrsqrt.pop %v775
      %v855 = vmul.f32 %v854, %v775
      %v856 = vmul.f32 %v855, %v854
      %v857 = vmul.f32 0.5, %v856
      %v858 = vsub.f32 1.5, %v857
      %v859 = vmul.f32 %v854, %v858
      %vm860 = vweird.f32 %v775
      %vm861 = vweird.f32 %v854
      %vm862 = vmor %vm860, %vm861
      %v863 = vsel %vm862, %v854, %v859
      %v864 = vrsqrt.pop %v776
      %v865 = vmul.f32 %v864, %v776
      %v866 = vmul.f32 %v865, %v864
      %v867 = vmul.f32 0.5, %v866
      %v868 = vsub.f32 1.5, %v867
      %v869 = vmul.f32 %v864, %v868
      %vm870 = vweird.f32 %v776
      %vm871 = vweird.f32 %v864
      %vm872 = vmor %vm870, %vm871
      %v873 = vsel %vm872, %v864, %v869
      %v874 = vrsqrt.pop %v777
      %v875 = vmul.f32 %v874, %v777
      %v876 = vmul.f32 %v875, %v874
      %v877 = vmul.f32 0.5, %v876
      %v878 = vsub.f32 1.5, %v877
      %v879 = vmul.f32 %v874, %v878
      %vm880 = vweird.f32 %v777
      %vm881 = vweird.f32 %v874
      %vm882 = vmor %vm880, %vm881
      %v883 = vsel %vm882, %v874, %v879
      %v884 = vrsqrt.pop %v778
      %v885 = vmul.f32 %v884, %v778
      %v886 = vmul.f32 %v885, %v884
      %v887 = vmul.f32 0.5, %v886
      %v888 = vsub.f32 1.5, %v887
      %v889 = vmul.f32 %v884, %v888
      %vm890 = vweird.f32 %v778
      %vm891 = vweird.f32 %v884
      %vm892 = vmor %vm890, %vm891
      %v893 = vsel %vm892, %v884, %v889
      %v894 = vrsqrt.pop %v779
      %v895 = vmul.f32 %v894, %v779
      %v896 = vmul.f32 %v895, %v894
      %v897 = vmul.f32 0.5, %v896
      %v898 = vsub.f32 1.5, %v897
      %v899 = vmul.f32 %v894, %v898
      %vm900 = vweird.f32 %v779
      %vm901 = vweird.f32 %v894
      %vm902 = vmor %vm900, %vm901
      %v903 = vsel %vm902, %v894, %v899
      %v904 = vrsqrt.pop %v780
      %v905 = vmul.f32 %v904, %v780
      %v906 = vmul.f32 %v905, %v904
      %v907 = vmul.f32 0.5, %v906
      %v908 = vsub.f32 1.5, %v907
      %v909 = vmul.f32 %v904, %v908
      %vm910 = vweird.f32 %v780
      %vm911 = vweird.f32 %v904
      %vm912 = vmor %vm910, %vm911
      %v913 = vsel %vm912, %v904, %v909
      %v914 = vrsqrt.pop %v781
      %v915 = vmul.f32 %v914, %v781
      %v916 = vmul.f32 %v915, %v914
      %v917 = vmul.f32 0.5, %v916
      %v918 = vsub.f32 1.5, %v917
      %v919 = vmul.f32 %v914, %v918
      %vm920 = vweird.f32 %v781
      %vm921 = vweird.f32 %v914
      %vm922 = vmor %vm920, %vm921
      %v923 = vsel %vm922, %v914, %v919
      %v924 = vrsqrt.pop %v782
      %v925 = vmul.f32 %v924, %v782
      %v926 = vmul.f32 %v925, %v924
      %v927 = vmul.f32 0.5, %v926
      %v928 = vsub.f32 1.5, %v927
      %v929 = vmul.f32 %v924, %v928
      %vm930 = vweird.f32 %v782
      %vm931 = vweird.f32 %v924
      %vm932 = vmor %vm930, %vm931
      %v933 = vsel %vm932, %v924, %v929
      %v934 = vrsqrt.pop %v783
      %v935 = vmul.f32 %v934, %v783
      %v936 = vmul.f32 %v935, %v934
      %v937 = vmul.f32 0.5, %v936
      %v938 = vsub.f32 1.5, %v937
      %v939 = vmul.f32 %v934, %v938
      %vm940 = vweird.f32 %v783
      %vm941 = vweird.f32 %v934
      %vm942 = vmor %vm940, %vm941
      %v943 = vsel %vm942, %v934, %v939
      %v944 = vmul.f32 %v309, %v793
      %v945 = vmul.f32 %v309, %v803
      %v946 = vmul.f32 %v309, %v813
      %v947 = vmul.f32 %v309, %v823
      %v948 = vmul.f32 %v309, %v833
      %v949 = vmul.f32 %v309, %v843
      %v950 = vmul.f32 %v309, %v853
      %v951 = vmul.f32 %v309, %v863
      %v952 = vmul.f32 %v309, %v873
      %v953 = vmul.f32 %v309, %v883
      %v954 = vmul.f32 %v309, %v893
      %v955 = vmul.f32 %v309, %v903
      %v956 = vmul.f32 %v309, %v913
      %v957 = vmul.f32 %v309, %v923
      %v958 = vmul.f32 %v309, %v933
      %v959 = vmul.f32 %v309, %v943
      %v960 = vmul.f32 %v688, %v944
      %v961 = vmul.f32 %v689, %v945
      %v962 = vmul.f32 %v690, %v946
      %v963 = vmul.f32 %v691, %v947
      %v964 = vmul.f32 %v692, %v948
      %v965 = vmul.f32 %v693, %v949
      %v966 = vmul.f32 %v694, %v950
      %v967 = vmul.f32 %v695, %v951
      %v968 = vmul.f32 %v696, %v952
      %v969 = vmul.f32 %v697, %v953
      %v970 = vmul.f32 %v698, %v954
      %v971 = vmul.f32 %v699, %v955
      %v972 = vmul.f32 %v700, %v956
      %v973 = vmul.f32 %v701, %v957
      %v974 = vmul.f32 %v702, %v958
      %v975 = vmul.f32 %v703, %v959
      %v976 = vsub.f32 %v310, %v960
      %v977 = vsub.f32 %v310, %v961
      %v978 = vsub.f32 %v310, %v962
      %v979 = vsub.f32 %v310, %v963
      %v980 = vsub.f32 %v310, %v964
      %v981 = vsub.f32 %v310, %v965
      %v982 = vsub.f32 %v310, %v966
      %v983 = vsub.f32 %v310, %v967
      %v984 = vsub.f32 %v310, %v968
      %v985 = vsub.f32 %v310, %v969
      %v986 = vsub.f32 %v310, %v970
      %v987 = vsub.f32 %v310, %v971
      %v988 = vsub.f32 %v310, %v972
      %v989 = vsub.f32 %v310, %v973
      %v990 = vsub.f32 %v310, %v974
      %v991 = vsub.f32 %v310, %v975
      %v992 = vperm.slane %v944, 0
      %v993 = vperm.slane %v945, 0
      %v994 = vperm.slane %v946, 0
      %v995 = vperm.slane %v947, 0
      %v996 = vperm.slane %v948, 0
      %v997 = vperm.slane %v949, 0
      %v998 = vperm.slane %v950, 0
      %v999 = vperm.slane %v951, 0
      %v1000 = vperm.slane %v952, 0
      %v1001 = vperm.slane %v953, 0
      %v1002 = vperm.slane %v954, 0
      %v1003 = vperm.slane %v955, 0
      %v1004 = vperm.slane %v956, 0
      %v1005 = vperm.slane %v957, 0
      %v1006 = vperm.slane %v958, 0
      %v1007 = vperm.slane %v959, 0
      %v1008 = vmul.f32 %v431, %v992
      %v1009 = vmul.f32 %v432, %v993
      %v1010 = vmul.f32 %v433, %v994
      %v1011 = vmul.f32 %v434, %v995
      %v1012 = vmul.f32 %v435, %v996
      %v1013 = vmul.f32 %v436, %v997
      %v1014 = vmul.f32 %v437, %v998
      %v1015 = vmul.f32 %v438, %v999
      %v1016 = vmul.f32 %v439, %v1000
      %v1017 = vmul.f32 %v440, %v1001
      %v1018 = vmul.f32 %v441, %v1002
      %v1019 = vmul.f32 %v442, %v1003
      %v1020 = vmul.f32 %v443, %v1004
      %v1021 = vmul.f32 %v444, %v1005
      %v1022 = vmul.f32 %v445, %v1006
      %v1023 = vmul.f32 %v446, %v1007
      %v1024 = vperm.slane %v976, 0
      %v1025 = vperm.slane %v977, 0
      %v1026 = vperm.slane %v978, 0
      %v1027 = vperm.slane %v979, 0
      %v1028 = vperm.slane %v980, 0
      %v1029 = vperm.slane %v981, 0
      %v1030 = vperm.slane %v982, 0
      %v1031 = vperm.slane %v983, 0
      %v1032 = vperm.slane %v984, 0
      %v1033 = vperm.slane %v985, 0
      %v1034 = vperm.slane %v986, 0
      %v1035 = vperm.slane %v987, 0
      %v1036 = vperm.slane %v988, 0
      %v1037 = vperm.slane %v989, 0
      %v1038 = vperm.slane %v990, 0
      %v1039 = vperm.slane %v991, 0
      %v1040 = vadd.f32 %v1008, %v1024
      %v1041 = vadd.f32 %v1009, %v1025
      %v1042 = vadd.f32 %v1010, %v1026
      %v1043 = vadd.f32 %v1011, %v1027
      %v1044 = vadd.f32 %v1012, %v1028
      %v1045 = vadd.f32 %v1013, %v1029
      %v1046 = vadd.f32 %v1014, %v1030
      %v1047 = vadd.f32 %v1015, %v1031
      %v1048 = vadd.f32 %v1016, %v1032
      %v1049 = vadd.f32 %v1017, %v1033
      %v1050 = vadd.f32 %v1018, %v1034
      %v1051 = vadd.f32 %v1019, %v1035
      %v1052 = vadd.f32 %v1020, %v1036
      %v1053 = vadd.f32 %v1021, %v1037
      %v1054 = vadd.f32 %v1022, %v1038
      %v1055 = vadd.f32 %v1023, %v1039
      %v1056 = vld [vmem:[%s4] sm:$0xff]
      %v1057 = vld [vmem:[%s4 + $0x8] sm:$0xff]
      %v1058 = vld [vmem:[%s4 + $0x10] sm:$0xff]
      %v1059 = vld [vmem:[%s4 + $0x18] sm:$0xff]
      %v1060 = vld [vmem:[%s4 + $0x20] sm:$0xff]
      %v1061 = vld [vmem:[%s4 + $0x28] sm:$0xff]
      %v1062 = vld [vmem:[%s4 + $0x30] sm:$0xff]
      %v1063 = vld [vmem:[%s4 + $0x38] sm:$0xff]
      %v1064 = vld [vmem:[%s4 + $0x40] sm:$0xff]
      %vm1065 = vcmask 64512
      %v1067 = vsel %vm1065, %v292, 0
      %v1070 = vsel %vm1065, %v293, 0
      %v1073 = vsel %vm1065, %v294, 0
      %v1076 = vsel %vm1065, %v295, 0
      %v1079 = vsel %vm1065, %v296, 0
      %v1082 = vsel %vm1065, %v297, 0
      %v1085 = vsel %vm1065, %v298, 0
      %v1088 = vsel %vm1065, %v299, 0
      %v1091 = vsel %vm1065, %v300, 0
      %v1094 = vsel %vm1065, %v301, 0
      %v1097 = vsel %vm1065, %v302, 0
      %v1100 = vsel %vm1065, %v303, 0
      %v1103 = vsel %vm1065, %v304, 0
      %v1106 = vsel %vm1065, %v305, 0
      %v1109 = vsel %vm1065, %v306, 0
      %v1112 = vsel %vm1065, %v307, 0
      %1114 = vmatpush.msra.mxu0 0.0
      %1115 = vmatpush.msra.mxu0 0.0
      %1116 = vmatpush.msra.mxu0 0.0
      %1117 = vmatpush.msra.mxu0 0.0
      %1118 = vmatpush.msra.mxu0 0.0
      %1119 = vmatpush.msra.mxu0 0.0
      %1120 = vmatpush.msra.mxu0 0.0
      %1121 = vmatpush.msra.mxu0 0.0
      %1122 = vmatpush.msra.mxu0 0.0
      %1123 = vmatpush.msra.mxu0 0.0
      %1124 = vmatpush.msra.mxu0 0.0
      %1125 = vmatpush.msra.mxu0 0.0
      %1126 = vmatpush.msra.mxu0 0.0
      %1127 = vmatpush.msra.mxu0 0.0
      %1128 = vmatpush.msra.mxu0 0.0
      %1129 = vmatpush.msra.mxu0 %v1064
      %1130 = vmatmul.f32.gmra.mxu0 %v1067
      %v1131 = vpop.f32.mrf.mxu0
      %v1132 = vadd.f32 0.0, %v1131
      %1133 = vmatmul.f32.gmra.mxu0 %v1070
      %v1134 = vpop.f32.mrf.mxu0
      %v1135 = vadd.f32 0.0, %v1134
      %1136 = vmatmul.f32.gmra.mxu0 %v1073
      %v1137 = vpop.f32.mrf.mxu0
      %v1138 = vadd.f32 0.0, %v1137
      %1139 = vmatmul.f32.gmra.mxu0 %v1076
      %v1140 = vpop.f32.mrf.mxu0
      %v1141 = vadd.f32 0.0, %v1140
      %1142 = vmatmul.f32.gmra.mxu0 %v1079
      %v1143 = vpop.f32.mrf.mxu0
      %v1144 = vadd.f32 0.0, %v1143
      %1145 = vmatmul.f32.gmra.mxu0 %v1082
      %v1146 = vpop.f32.mrf.mxu0
      %v1147 = vadd.f32 0.0, %v1146
      %1148 = vmatmul.f32.gmra.mxu0 %v1085
      %v1149 = vpop.f32.mrf.mxu0
      %v1150 = vadd.f32 0.0, %v1149
      %1151 = vmatmul.f32.gmra.mxu0 %v1088
      %v1152 = vpop.f32.mrf.mxu0
      %v1153 = vadd.f32 0.0, %v1152
      %1154 = vmatmul.f32.gmra.mxu0 %v1091
      %v1155 = vpop.f32.mrf.mxu0
      %v1156 = vadd.f32 0.0, %v1155
      %1157 = vmatmul.f32.gmra.mxu0 %v1094
      %v1158 = vpop.f32.mrf.mxu0
      %v1159 = vadd.f32 0.0, %v1158
      %1160 = vmatmul.f32.gmra.mxu0 %v1097
      %v1161 = vpop.f32.mrf.mxu0
      %v1162 = vadd.f32 0.0, %v1161
      %1163 = vmatmul.f32.gmra.mxu0 %v1100
      %v1164 = vpop.f32.mrf.mxu0
      %v1165 = vadd.f32 0.0, %v1164
      %1166 = vmatmul.f32.gmra.mxu0 %v1103
      %v1167 = vpop.f32.mrf.mxu0
      %v1168 = vadd.f32 0.0, %v1167
      %1169 = vmatmul.f32.gmra.mxu0 %v1106
      %v1170 = vpop.f32.mrf.mxu0
      %v1171 = vadd.f32 0.0, %v1170
      %1172 = vmatmul.f32.gmra.mxu0 %v1109
      %v1173 = vpop.f32.mrf.mxu0
      %v1174 = vadd.f32 0.0, %v1173
      %1175 = vmatmul.f32.gmra.mxu0 %v1112
      %v1176 = vpop.f32.mrf.mxu0
      %v1177 = vadd.f32 0.0, %v1176
      %1178 = vdwg.mxu0
      %v1180 = vsel %vm447, %v1040, 0
      %v1183 = vsel %vm447, %v1041, 0
      %v1186 = vsel %vm447, %v1042, 0
      %v1189 = vsel %vm447, %v1043, 0
      %v1192 = vsel %vm447, %v1044, 0
      %v1195 = vsel %vm447, %v1045, 0
      %v1198 = vsel %vm447, %v1046, 0
      %v1201 = vsel %vm447, %v1047, 0
      %v1204 = vsel %vm447, %v1048, 0
      %v1207 = vsel %vm447, %v1049, 0
      %v1210 = vsel %vm447, %v1050, 0
      %v1213 = vsel %vm447, %v1051, 0
      %v1216 = vsel %vm447, %v1052, 0
      %v1219 = vsel %vm447, %v1053, 0
      %v1222 = vsel %vm447, %v1054, 0
      %v1225 = vsel %vm447, %v1055, 0
      %1227 = vmatpush.msra.mxu0 0.0
      %1228 = vmatpush.msra.mxu0 0.0
      %1229 = vmatpush.msra.mxu0 0.0
      %1230 = vmatpush.msra.mxu0 0.0
      %1231 = vmatpush.msra.mxu0 0.0
      %1232 = vmatpush.msra.mxu0 0.0
      %1233 = vmatpush.msra.mxu0 0.0
      %1234 = vmatpush.msra.mxu0 0.0
      %1235 = vmatpush.msra.mxu0 %v1063
      %1236 = vmatpush.msra.mxu0 %v1062
      %1237 = vmatpush.msra.mxu0 %v1061
      %1238 = vmatpush.msra.mxu0 %v1060
      %1239 = vmatpush.msra.mxu0 %v1059
      %1240 = vmatpush.msra.mxu0 %v1058
      %1241 = vmatpush.msra.mxu0 %v1057
      %1242 = vmatpush.msra.mxu0 %v1056
      %1243 = vmatmul.f32.gmra.mxu0 %v1180
      %v1244 = vpop.f32.mrf.mxu0
      %v1245 = vadd.f32 %v1132, %v1244
      %1246 = vmatmul.f32.gmra.mxu0 %v1183
      %v1247 = vpop.f32.mrf.mxu0
      %v1248 = vadd.f32 %v1135, %v1247
      %1249 = vmatmul.f32.gmra.mxu0 %v1186
      %v1250 = vpop.f32.mrf.mxu0
      %v1251 = vadd.f32 %v1138, %v1250
      %1252 = vmatmul.f32.gmra.mxu0 %v1189
      %v1253 = vpop.f32.mrf.mxu0
      %v1254 = vadd.f32 %v1141, %v1253
      %1255 = vmatmul.f32.gmra.mxu0 %v1192
      %v1256 = vpop.f32.mrf.mxu0
      %v1257 = vadd.f32 %v1144, %v1256
      %1258 = vmatmul.f32.gmra.mxu0 %v1195
      %v1259 = vpop.f32.mrf.mxu0
      %v1260 = vadd.f32 %v1147, %v1259
      %1261 = vmatmul.f32.gmra.mxu0 %v1198
      %v1262 = vpop.f32.mrf.mxu0
      %v1263 = vadd.f32 %v1150, %v1262
      %1264 = vmatmul.f32.gmra.mxu0 %v1201
      %v1265 = vpop.f32.mrf.mxu0
      %v1266 = vadd.f32 %v1153, %v1265
      %1267 = vmatmul.f32.gmra.mxu0 %v1204
      %v1268 = vpop.f32.mrf.mxu0
      %v1269 = vadd.f32 %v1156, %v1268
      %1270 = vmatmul.f32.gmra.mxu0 %v1207
      %v1271 = vpop.f32.mrf.mxu0
      %v1272 = vadd.f32 %v1159, %v1271
      %1273 = vmatmul.f32.gmra.mxu0 %v1210
      %v1274 = vpop.f32.mrf.mxu0
      %v1275 = vadd.f32 %v1162, %v1274
      %1276 = vmatmul.f32.gmra.mxu0 %v1213
      %v1277 = vpop.f32.mrf.mxu0
      %v1278 = vadd.f32 %v1165, %v1277
      %1279 = vmatmul.f32.gmra.mxu0 %v1216
      %v1280 = vpop.f32.mrf.mxu0
      %v1281 = vadd.f32 %v1168, %v1280
      %1282 = vmatmul.f32.gmra.mxu0 %v1219
      %v1283 = vpop.f32.mrf.mxu0
      %v1284 = vadd.f32 %v1171, %v1283
      %1285 = vmatmul.f32.gmra.mxu0 %v1222
      %v1286 = vpop.f32.mrf.mxu0
      %v1287 = vadd.f32 %v1174, %v1286
      %1288 = vmatmul.f32.gmra.mxu0 %v1225
      %v1289 = vpop.f32.mrf.mxu0
      %v1290 = vadd.f32 %v1177, %v1289
      %1291 = vdwg.mxu0
      %v1292 = vperm.slane %v311, 0
      %v1293 = vadd.f32 %v1245, %v1292
      %v1294 = vadd.f32 %v1248, %v1292
      %v1295 = vadd.f32 %v1251, %v1292
      %v1296 = vadd.f32 %v1254, %v1292
      %v1297 = vadd.f32 %v1257, %v1292
      %v1298 = vadd.f32 %v1260, %v1292
      %v1299 = vadd.f32 %v1263, %v1292
      %v1300 = vadd.f32 %v1266, %v1292
      %v1301 = vadd.f32 %v1269, %v1292
      %v1302 = vadd.f32 %v1272, %v1292
      %v1303 = vadd.f32 %v1275, %v1292
      %v1304 = vadd.f32 %v1278, %v1292
      %v1305 = vadd.f32 %v1281, %v1292
      %v1306 = vadd.f32 %v1284, %v1292
      %v1307 = vadd.f32 %v1287, %v1292
      %v1308 = vadd.f32 %v1290, %v1292
      %v1309 = vmax.f32 %v1293, 0.0
      %v1310 = vmax.f32 %v1294, 0.0
      %v1311 = vmax.f32 %v1295, 0.0
      %v1312 = vmax.f32 %v1296, 0.0
      %v1313 = vmax.f32 %v1297, 0.0
      %v1314 = vmax.f32 %v1298, 0.0
      %v1315 = vmax.f32 %v1299, 0.0
      %v1316 = vmax.f32 %v1300, 0.0
      %v1317 = vmax.f32 %v1301, 0.0
      %v1318 = vmax.f32 %v1302, 0.0
      %v1319 = vmax.f32 %v1303, 0.0
      %v1320 = vmax.f32 %v1304, 0.0
      %v1321 = vmax.f32 %v1305, 0.0
      %v1322 = vmax.f32 %v1306, 0.0
      %v1323 = vmax.f32 %v1307, 0.0
      %v1324 = vmax.f32 %v1308, 0.0
      %v1325 = vperm.slane %v312, 0
      %v1326 = vmul.f32 %v1309, %v1325
      %v1327 = vmul.f32 %v1310, %v1325
      %v1328 = vmul.f32 %v1311, %v1325
      %v1329 = vmul.f32 %v1312, %v1325
      %v1330 = vmul.f32 %v1313, %v1325
      %v1331 = vmul.f32 %v1314, %v1325
      %v1332 = vmul.f32 %v1315, %v1325
      %v1333 = vmul.f32 %v1316, %v1325
      %v1334 = vmul.f32 %v1317, %v1325
      %v1335 = vmul.f32 %v1318, %v1325
      %v1336 = vmul.f32 %v1319, %v1325
      %v1337 = vmul.f32 %v1320, %v1325
      %v1338 = vmul.f32 %v1321, %v1325
      %v1339 = vmul.f32 %v1322, %v1325
      %v1340 = vmul.f32 %v1323, %v1325
      %v1341 = vmul.f32 %v1324, %v1325
      %vm1342 = vcmask 261120
      %v1343 = vsel %vm1342, %v1326, 0.0
      %1344 = vadd.xlane.f32.xlu0 %v1343
      %v1345 = vpop.xlane.xlu0 %1344
      %v1346 = vsel %vm1342, %v1327, 0.0
      %1347 = vadd.xlane.f32.xlu0 %v1346
      %v1348 = vpop.xlane.xlu0 %1347
      %v1349 = vsel %vm1342, %v1328, 0.0
      %1350 = vadd.xlane.f32.xlu0 %v1349
      %v1351 = vpop.xlane.xlu0 %1350
      %v1352 = vsel %vm1342, %v1329, 0.0
      %1353 = vadd.xlane.f32.xlu0 %v1352
      %v1354 = vpop.xlane.xlu0 %1353
      %v1355 = vsel %vm1342, %v1330, 0.0
      %1356 = vadd.xlane.f32.xlu0 %v1355
      %v1357 = vpop.xlane.xlu0 %1356
      %v1358 = vsel %vm1342, %v1331, 0.0
      %1359 = vadd.xlane.f32.xlu0 %v1358
      %v1360 = vpop.xlane.xlu0 %1359
      %v1361 = vsel %vm1342, %v1332, 0.0
      %1362 = vadd.xlane.f32.xlu0 %v1361
      %v1363 = vpop.xlane.xlu0 %1362
      %v1364 = vsel %vm1342, %v1333, 0.0
      %1365 = vadd.xlane.f32.xlu0 %v1364
      %v1366 = vpop.xlane.xlu0 %1365
      %v1367 = vsel %vm1342, %v1334, 0.0
      %1368 = vadd.xlane.f32.xlu0 %v1367
      %v1369 = vpop.xlane.xlu0 %1368
      %v1370 = vsel %vm1342, %v1335, 0.0
      %1371 = vadd.xlane.f32.xlu0 %v1370
      %v1372 = vpop.xlane.xlu0 %1371
      %v1373 = vsel %vm1342, %v1336, 0.0
      %1374 = vadd.xlane.f32.xlu0 %v1373
      %v1375 = vpop.xlane.xlu0 %1374
      %v1376 = vsel %vm1342, %v1337, 0.0
      %1377 = vadd.xlane.f32.xlu0 %v1376
      %v1378 = vpop.xlane.xlu0 %1377
      %v1379 = vsel %vm1342, %v1338, 0.0
      %1380 = vadd.xlane.f32.xlu0 %v1379
      %v1381 = vpop.xlane.xlu0 %1380
      %v1382 = vsel %vm1342, %v1339, 0.0
      %1383 = vadd.xlane.f32.xlu0 %v1382
      %v1384 = vpop.xlane.xlu0 %1383
      %v1385 = vsel %vm1342, %v1340, 0.0
      %1386 = vadd.xlane.f32.xlu0 %v1385
      %v1387 = vpop.xlane.xlu0 %1386
      %v1388 = vsel %vm1342, %v1341, 0.0
      %1389 = vadd.xlane.f32.xlu0 %v1388
      %v1390 = vpop.xlane.xlu0 %1389
      %s1392 = vtos %v313
      %v1393 = vstv %s1392
      %v1395 = vadd.f32 %v1345, %v1393
      %v1396 = vadd.f32 %v1348, %v1393
      %v1397 = vadd.f32 %v1351, %v1393
      %v1398 = vadd.f32 %v1354, %v1393
      %v1399 = vadd.f32 %v1357, %v1393
      %v1400 = vadd.f32 %v1360, %v1393
      %v1401 = vadd.f32 %v1363, %v1393
      %v1402 = vadd.f32 %v1366, %v1393
      %v1403 = vadd.f32 %v1369, %v1393
      %v1404 = vadd.f32 %v1372, %v1393
      %v1405 = vadd.f32 %v1375, %v1393
      %v1406 = vadd.f32 %v1378, %v1393
      %v1407 = vadd.f32 %v1381, %v1393
      %v1408 = vadd.f32 %v1384, %v1393
      %v1409 = vadd.f32 %v1387, %v1393
      %v1410 = vadd.f32 %v1390, %v1393
      %v1427 = vlaneseq
      %v1428 = vand.u32 %v1427, 127
      %v1429 = vperm.slane %v1395, %v1428
      %v1430 = vperm.slane %v1396, %v1428
      %v1431 = vperm.slane %v1397, %v1428
      %v1432 = vperm.slane %v1398, %v1428
      %v1433 = vperm.slane %v1399, %v1428
      %v1434 = vperm.slane %v1400, %v1428
      %v1435 = vperm.slane %v1401, %v1428
      %v1436 = vperm.slane %v1402, %v1428
      %v1437 = vperm.slane %v1403, %v1428
      %v1438 = vperm.slane %v1404, %v1428
      %v1439 = vperm.slane %v1405, %v1428
      %v1440 = vperm.slane %v1406, %v1428
      %v1441 = vperm.slane %v1407, %v1428
      %v1442 = vperm.slane %v1408, %v1428
      %v1443 = vperm.slane %v1409, %v1428
      %v1444 = vperm.slane %v1410, %v1428
      %vm1445 = vcmask 1041409
      %v1446 = vsel %vm1445, %v1430, %v1429
      %vm1447 = vcmask 1042434
      %v1448 = vsel %vm1447, %v1431, %v1446
      %vm1449 = vcmask 1043459
      %v1450 = vsel %vm1449, %v1432, %v1448
      %vm1451 = vcmask 1044484
      %v1452 = vsel %vm1451, %v1433, %v1450
      %vm1453 = vcmask 1045509
      %v1454 = vsel %vm1453, %v1434, %v1452
      %vm1455 = vcmask 1046534
      %v1456 = vsel %vm1455, %v1435, %v1454
      %vm1457 = vcmask 1047559
      %v1458 = vsel %vm1457, %v1436, %v1456
      %v1459 = vsel %vm1445, %v1438, %v1437
      %v1460 = vsel %vm1447, %v1439, %v1459
      %v1461 = vsel %vm1449, %v1440, %v1460
      %v1462 = vsel %vm1451, %v1441, %v1461
      %v1463 = vsel %vm1453, %v1442, %v1462
      %v1464 = vsel %vm1455, %v1443, %v1463
      %v1465 = vsel %vm1457, %v1444, %v1464
      %1468 = vst.msk [vmem:[%s275] sm:$0xff] %vm1065, %v1458
      %1469 = vst.msk [vmem:[%s275 + $0x8] sm:$0xff] %vm1065, %v1465
      %p1470 = scmp.lt.s32.totalorder %s17, 1
      %s1471 = scalar_select %p1470, %s17, 1
      %s1472 = smul.addr %s1471, 2
      %s1473 = smul.addr %s1472, 8
      %s1474 = scalar_lea.vmem %s6, %s1473
      // Predicated region
      $region45: #{tpu_custom_call.1} parent=43 // pred_check
        %p1475 = pneg %p171
      $region46: #{tpu_custom_call.1} parent=43 // pred_check_branch
        %1477 = sbr.rel (%p1475) target = $region48
      $region47: #{tpu_custom_call.1} parent=43 // pred_region
        _
      $region48: #{tpu_custom_call.1} parent=43 // pred_fallthru
        _
    $region44: #{tpu_custom_call.1} parent=5 // pred_fallthru
      _
    %p1478 = scmp.le.s32.totalorder 2, %s12
    // Predicated region
    $region49: #{tpu_custom_call.1} parent=5 // pred_check
      %p1479 = pneg %p1478
    $region50: #{tpu_custom_call.1} parent=5 // pred_check_branch
      %1481 = sbr.rel (%p1479) target = $region52
    $region51: #{tpu_custom_call.1} parent=5 // pred_region
      %s1482 = ssub.s32 %s12, 2
      // Predicated region
      $region53: #{tpu_custom_call.1} parent=51 // pred_check
        %p1483 = pneg %p177
      $region54: #{tpu_custom_call.1} parent=51 // pred_check_branch
        %1485 = sbr.rel (%p1483) target = $region56
      $region55: #{tpu_custom_call.1} parent=51 // pred_region
        %p1486 = scmp.lt.s32.totalorder %s18, 1
        %s1487 = scalar_select %p1486, %s18, 1
        %s1488 = smul.addr %s1487, 2
        %s1489 = smul.addr %s1488, 8
        %s1490 = scalar_lea.vmem %s6, %s1489
      $region56: #{tpu_custom_call.1} parent=51 // pred_fallthru
        _
    $region52: #{tpu_custom_call.1} parent=5 // pred_fallthru
      _
  $region6: #{tpu_custom_call.1} parent=0 // loop_footer
    %s16 = sadd.s32 1, %s12
  $region7: #{tpu_custom_call.1} parent=0 // loop_footer_branch
    %11 = sbr.rel target = $region3
  $region8: #{tpu_custom_call.1} parent=0 // loop_exit
    _

</llo_original>
